<compile_context>
chip_gen: v7x
topology: tpu7x:2x2x1
jax: 0.10.0
libtpu: 0.0.40
codegen_flags: <defaults>
</compile_context>

<pallas_src>
import jax
import jax.numpy as jnp
from jax.experimental import pallas as pl
from jax.experimental.pallas import tpu as pltpu

SUBLANES = 8   # vreg sublane width


def _round_up(x, m):
    return (x + m - 1) // m * m


def _mish(y):
    # mish(y) = y * tanh(softplus(y)); with t = 1 + e^y,
    # tanh(log t) = (t^2 - 1) / (t^2 + 1).
    # PyTorch softplus threshold=20: above it, mish(y) ~= y (tanh saturated).
    # Cost: 1 exp (EUP) + 1 approx reciprocal (EUP) per element.
    t = 1.0 + jnp.exp(jnp.minimum(y, 20.0))
    t2 = t * t
    tanh_sp = (t2 - 1.0) * pl.reciprocal(t2 + 1.0, approx=True)
    return jnp.where(y > 20.0, y, y * tanh_sp)


def _make_fused_mlp_kernel(n_layers, use_layernorm, eps):
    """Fused kernel body: all Linear (+ LayerNorm + Mish) layers in one pass."""

    def kernel(x_ref, *refs):
        o_ref = refs[-1]
        p = refs[:-1]
        h = x_ref[...].astype(jnp.float32)
        idx = 0
        for i in range(n_layers):
            w = p[idx][...]        # bf16 (d_in, d_out)
            b = p[idx + 1][...]    # f32  (1, d_out)
            idx += 2
            # bf16 MXU operands, f32 accumulation.
            y = jnp.dot(h.astype(jnp.bfloat16), w,
                        preferred_element_type=jnp.float32) + b
            if i < n_layers - 1:
                if use_layernorm:
                    g = p[idx][...]
                    beta = p[idx + 1][...]
                    idx += 2
                    # Two-pass stats (no E[y^2]-E[y]^2 cancellation).
                    mean = jnp.mean(y, axis=-1, keepdims=True)
                    var = jnp.mean(jnp.square(y - mean), axis=-1, keepdims=True)
                    y = (y - mean) * jax.lax.rsqrt(var + eps)
                    y = y * g + beta
                h = _mish(y)
            else:
                o_ref[...] = y.astype(o_ref.dtype)

    return kernel


def pack_params(params, use_layernorm):
    """One-time (hoisted out of the forward call) parameter prep.

    Weights -> bf16 for the MXU; biases / LayerNorm params stay f32.
    """
    Ws, bs, gs, betas = params["W"], params["b"], params["g"], params["beta"]
    n = len(Ws)
    flat = []
    for i in range(n):
        flat.append(Ws[i].astype(jnp.bfloat16))
        flat.append(bs[i].astype(jnp.float32))
        if use_layernorm and i < n - 1:
            flat.append(gs[i].astype(jnp.float32))
            flat.append(betas[i].astype(jnp.float32))
    return flat


def mlp_forward(x, flat_params, dims, use_layernorm, *, eps=1e-5,
                batch_tile=2048):
    """Fused MLP forward: x (B, dims[0]) -> (B, dims[-1])."""
    B = x.shape[0]
    d_in, d_out = dims[0], dims[-1]
    n_layers = len(dims) - 1

    # Batch tile: as big as reasonable (per-step overhead ~0.35us, tile sweep
    # plateaus around 1-2K rows), but keep >= ~4 grid steps at large B so the
    # "parallel" axis actually shards across v7x's two TensorCores.  Always a
    # multiple of 8 sublanes.
    TB = min(batch_tile, max(SUBLANES, _round_up(pl.cdiv(B, 4), SUBLANES)))
    n_steps = pl.cdiv(B, TB)

    # True-width activation blocks (last dim == full array dim, which is
    # allowed); no HBM lane padding, no wrapper pad/slice passes.
    x_spec_kwargs = {}
    if n_steps >= 3:
        # Deeper input pipelining only when the grid is long enough to use it.
        x_spec_kwargs["pipeline_mode"] = pl.Buffered(3)
    x_spec = pl.BlockSpec((TB, d_in), lambda i: (i, 0), **x_spec_kwargs)
    out_spec = pl.BlockSpec((TB, d_out), lambda i: (i, 0))

    # Params: whole-array blocks with a constant index_map -> VMEM-resident
    # across all grid steps (no re-DMA).
    param_specs = [pl.BlockSpec(a.shape, lambda i: (0, 0)) for a in flat_params]

    kernel = _make_fused_mlp_kernel(n_layers, use_layernorm, eps)
    return pl.pallas_call(
        kernel,
        out_shape=jax.ShapeDtypeStruct((B, d_out), x.dtype),
        grid=(n_steps,),
        in_specs=[x_spec] + param_specs,
        out_specs=out_spec,
        compiler_params=pltpu.CompilerParams(
            dimension_semantics=("parallel",)),
    )(x, *flat_params)


def init_mlp_params(key, dims, use_layernorm):
    """Deterministic init mimicking nn.Linear default (uniform +-1/sqrt(fan_in))."""
    weights, biases, gammas, betas = [], [], [], []
    for i in range(len(dims) - 1):
        d_in, d_out = dims[i], dims[i + 1]
        key, kw, kb = jax.random.split(key, 3)
        bound = 1.0 / jnp.sqrt(d_in)
        # Stored pre-transposed: (D_in, D_out) so the kernel does x @ W + b.
        W = jax.random.uniform(kw, (d_in, d_out), jnp.float32, -bound, bound)
        b = jax.random.uniform(kb, (1, d_out), jnp.float32, -bound, bound)
        weights.append(W)
        biases.append(b)
        if use_layernorm and i < len(dims) - 2:
            gammas.append(jnp.ones((1, d_out), jnp.float32))
            betas.append(jnp.zeros((1, d_out), jnp.float32))
    return {"W": weights, "b": biases, "g": gammas, "beta": betas}


# Pure-JAX f32 reference (matches the PyTorch forward).
def mlp_reference(x, params, use_layernorm, eps=1e-5):
    n = len(params["W"])
    for i in range(n - 1):
        y = x @ params["W"][i] + params["b"][i]
        if use_layernorm:
            mu = jnp.mean(y, axis=-1, keepdims=True)
            var = jnp.mean(jnp.square(y - mu), axis=-1, keepdims=True)
            y = (y - mu) * jax.lax.rsqrt(var + eps)
            y = y * params["g"][i] + params["beta"][i]
        x = y * jnp.tanh(jax.nn.softplus(y))
    return x @ params["W"][n - 1] + params["b"][n - 1]


if __name__ == "__main__":
    key = jax.random.PRNGKey(0)
    dims = [16, 32, 32, 8]          # MLP([16, 32, 32, 8])
    B = 16                          # 2 grid steps of 8 rows each

    kx, kp = jax.random.split(key)
    x = jax.random.normal(kx, (B, dims[0]), jnp.float32)

    for use_layernorm in (True, False):
        params = init_mlp_params(kp, dims, use_layernorm)
        flat = pack_params(params, use_layernorm)   # hoisted one-time prep
        out = mlp_forward(x, flat, dims, use_layernorm)
        out = jax.block_until_ready(out)

        ref = mlp_reference(x, params, use_layernorm)
        assert out.shape == (B, dims[-1])
        # Tolerance accounts for bf16 MXU operands (f32 accumulation) and the
        # approx EUP reciprocal / softplus threshold=20 used in Mish.
        err = float(jnp.max(jnp.abs(out - ref)))
        assert jnp.allclose(out, ref, atol=3e-2, rtol=3e-2), err

    print("KERNEL_OK")
</pallas_src>

<mosaic_0001>
module attributes {stable_mosaic.version = 11 : i64} {
  func.func @kernel(%arg0: i32, %arg1: memref<8x16xf32, #tpu.memory_space<vmem>>, %arg2: memref<16x32xbf16, #tpu.memory_space<vmem>>, %arg3: memref<1x32xf32, #tpu.memory_space<vmem>>, %arg4: memref<1x32xf32, #tpu.memory_space<vmem>>, %arg5: memref<1x32xf32, #tpu.memory_space<vmem>>, %arg6: memref<32x32xbf16, #tpu.memory_space<vmem>>, %arg7: memref<1x32xf32, #tpu.memory_space<vmem>>, %arg8: memref<1x32xf32, #tpu.memory_space<vmem>>, %arg9: memref<1x32xf32, #tpu.memory_space<vmem>>, %arg10: memref<32x8xbf16, #tpu.memory_space<vmem>>, %arg11: memref<1x8xf32, #tpu.memory_space<vmem>>, %arg12: memref<8x8xf32, #tpu.memory_space<vmem>>) attributes {dimension_semantics = [#tpu.dimension_semantics<parallel>], iteration_bounds = array<i64: 2>, scalar_prefetch = 0 : i64, scratch_operands = 0 : i64, tpu.core_type = #tpu.core_type<tc>, window_params = [{transform_indices = @transform_0, window_bounds = array<i64: 8, 16>}, {pipeline_mode = #tpu.pipeline_mode<synchronous>, transform_indices = @transform_1, window_bounds = array<i64: 16, 32>}, {pipeline_mode = #tpu.pipeline_mode<synchronous>, transform_indices = @transform_2, window_bounds = array<i64: 1, 32>}, {pipeline_mode = #tpu.pipeline_mode<synchronous>, transform_indices = @transform_3, window_bounds = array<i64: 1, 32>}, {pipeline_mode = #tpu.pipeline_mode<synchronous>, transform_indices = @transform_4, window_bounds = array<i64: 1, 32>}, {pipeline_mode = #tpu.pipeline_mode<synchronous>, transform_indices = @transform_5, window_bounds = array<i64: 32, 32>}, {pipeline_mode = #tpu.pipeline_mode<synchronous>, transform_indices = @transform_6, window_bounds = array<i64: 1, 32>}, {pipeline_mode = #tpu.pipeline_mode<synchronous>, transform_indices = @transform_7, window_bounds = array<i64: 1, 32>}, {pipeline_mode = #tpu.pipeline_mode<synchronous>, transform_indices = @transform_8, window_bounds = array<i64: 1, 32>}, {pipeline_mode = #tpu.pipeline_mode<synchronous>, transform_indices = @transform_9, window_bounds = array<i64: 32, 8>}, {pipeline_mode = #tpu.pipeline_mode<synchronous>, transform_indices = @transform_10, window_bounds = array<i64: 1, 8>}, {transform_indices = @transform_11, window_bounds = array<i64: 8, 8>}]} {
    %c0 = arith.constant 0 : index
    %c0_0 = arith.constant 0 : index
    %0 = vector.load %arg1[%c0, %c0_0] : memref<8x16xf32, #tpu.memory_space<vmem>>, vector<8x16xf32>
    %c0_1 = arith.constant 0 : index
    %c0_2 = arith.constant 0 : index
    %1 = vector.load %arg2[%c0_1, %c0_2] : memref<16x32xbf16, #tpu.memory_space<vmem>>, vector<16x32xbf16>
    %c0_3 = arith.constant 0 : index
    %c0_4 = arith.constant 0 : index
    %2 = vector.load %arg3[%c0_3, %c0_4] : memref<1x32xf32, #tpu.memory_space<vmem>>, vector<1x32xf32>
    %3 = arith.truncf %0 : vector<8x16xf32> to vector<8x16xbf16>
    %cst = arith.constant dense<0.000000e+00> : vector<8x32xf32>
    %4 = tpu.matmul %3, %1, %cst {dimension_numbers = #tpu.dot_dimension_numbers<[1], [0], [0], [1], [0, 0, 1, 1], [], []>} : vector<8x16xbf16>, vector<16x32xbf16>, vector<8x32xf32> -> vector<8x32xf32>
    %5 = vector.broadcast %2 : vector<1x32xf32> to vector<8x32xf32>
    %6 = arith.addf %4, %5 : vector<8x32xf32>
    %c0_5 = arith.constant 0 : index
    %c0_6 = arith.constant 0 : index
    %7 = vector.load %arg4[%c0_5, %c0_6] : memref<1x32xf32, #tpu.memory_space<vmem>>, vector<1x32xf32>
    %c0_7 = arith.constant 0 : index
    %c0_8 = arith.constant 0 : index
    %8 = vector.load %arg5[%c0_7, %c0_8] : memref<1x32xf32, #tpu.memory_space<vmem>>, vector<1x32xf32>
    %cst_9 = arith.constant dense<0.000000e+00> : vector<8xf32>
    %9 = vector.multi_reduction <add>, %6, %cst_9 [1] : vector<8x32xf32> to vector<8xf32>
    %10 = vector.shape_cast %9 : vector<8xf32> to vector<8x1xf32>
    %cst_10 = arith.constant 3.200000e+01 : f32
    %11 = vector.broadcast %cst_10 : f32 to vector<8x1xf32>
    %12 = arith.divf %10, %11 : vector<8x1xf32>
    %13 = vector.broadcast %12 : vector<8x1xf32> to vector<8x32xf32>
    %14 = arith.subf %6, %13 : vector<8x32xf32>
    %15 = arith.mulf %14, %14 : vector<8x32xf32>
    %cst_11 = arith.constant dense<0.000000e+00> : vector<8xf32>
    %16 = vector.multi_reduction <add>, %15, %cst_11 [1] : vector<8x32xf32> to vector<8xf32>
    %17 = vector.shape_cast %16 : vector<8xf32> to vector<8x1xf32>
    %cst_12 = arith.constant 3.200000e+01 : f32
    %18 = vector.broadcast %cst_12 : f32 to vector<8x1xf32>
    %19 = arith.divf %17, %18 : vector<8x1xf32>
    %20 = vector.broadcast %12 : vector<8x1xf32> to vector<8x32xf32>
    %21 = arith.subf %6, %20 : vector<8x32xf32>
    %cst_13 = arith.constant 9.99999974E-6 : f32
    %22 = vector.broadcast %cst_13 : f32 to vector<8x1xf32>
    %23 = arith.addf %19, %22 : vector<8x1xf32>
    %24 = math.rsqrt %23 : vector<8x1xf32>
    %25 = vector.broadcast %24 : vector<8x1xf32> to vector<8x32xf32>
    %26 = arith.mulf %21, %25 : vector<8x32xf32>
    %27 = vector.broadcast %7 : vector<1x32xf32> to vector<8x32xf32>
    %28 = arith.mulf %26, %27 : vector<8x32xf32>
    %29 = vector.broadcast %8 : vector<1x32xf32> to vector<8x32xf32>
    %30 = arith.addf %28, %29 : vector<8x32xf32>
    %cst_14 = arith.constant 2.000000e+01 : f32
    %31 = vector.broadcast %cst_14 : f32 to vector<8x32xf32>
    %32 = arith.minimumf %30, %31 : vector<8x32xf32>
    %33 = math.exp %32 : vector<8x32xf32>
    %cst_15 = arith.constant 1.000000e+00 : f32
    %34 = vector.broadcast %cst_15 : f32 to vector<8x32xf32>
    %35 = arith.addf %34, %33 : vector<8x32xf32>
    %36 = arith.mulf %35, %35 : vector<8x32xf32>
    %cst_16 = arith.constant 1.000000e+00 : f32
    %37 = vector.broadcast %cst_16 : f32 to vector<8x32xf32>
    %38 = arith.subf %36, %37 : vector<8x32xf32>
    %cst_17 = arith.constant 1.000000e+00 : f32
    %39 = vector.broadcast %cst_17 : f32 to vector<8x32xf32>
    %40 = arith.addf %36, %39 : vector<8x32xf32>
    %41 = tpu.reciprocal %40 {approx = true} : vector<8x32xf32> -> vector<8x32xf32>
    %42 = arith.mulf %38, %41 : vector<8x32xf32>
    %cst_18 = arith.constant 2.000000e+01 : f32
    %43 = vector.broadcast %cst_18 : f32 to vector<8x32xf32>
    %44 = arith.cmpf ogt, %30, %43 : vector<8x32xf32>
    %45 = arith.mulf %30, %42 : vector<8x32xf32>
    %46 = arith.select %44, %30, %45 : vector<8x32xi1>, vector<8x32xf32>
    %c0_19 = arith.constant 0 : index
    %c0_20 = arith.constant 0 : index
    %47 = vector.load %arg6[%c0_19, %c0_20] : memref<32x32xbf16, #tpu.memory_space<vmem>>, vector<32x32xbf16>
    %c0_21 = arith.constant 0 : index
    %c0_22 = arith.constant 0 : index
    %48 = vector.load %arg7[%c0_21, %c0_22] : memref<1x32xf32, #tpu.memory_space<vmem>>, vector<1x32xf32>
    %49 = arith.truncf %46 : vector<8x32xf32> to vector<8x32xbf16>
    %cst_23 = arith.constant dense<0.000000e+00> : vector<8x32xf32>
    %50 = tpu.matmul %49, %47, %cst_23 {dimension_numbers = #tpu.dot_dimension_numbers<[1], [0], [0], [1], [0, 0, 1, 1], [], []>} : vector<8x32xbf16>, vector<32x32xbf16>, vector<8x32xf32> -> vector<8x32xf32>
    %51 = vector.broadcast %48 : vector<1x32xf32> to vector<8x32xf32>
    %52 = arith.addf %50, %51 : vector<8x32xf32>
    %c0_24 = arith.constant 0 : index
    %c0_25 = arith.constant 0 : index
    %53 = vector.load %arg8[%c0_24, %c0_25] : memref<1x32xf32, #tpu.memory_space<vmem>>, vector<1x32xf32>
    %c0_26 = arith.constant 0 : index
    %c0_27 = arith.constant 0 : index
    %54 = vector.load %arg9[%c0_26, %c0_27] : memref<1x32xf32, #tpu.memory_space<vmem>>, vector<1x32xf32>
    %cst_28 = arith.constant dense<0.000000e+00> : vector<8xf32>
    %55 = vector.multi_reduction <add>, %52, %cst_28 [1] : vector<8x32xf32> to vector<8xf32>
    %56 = vector.shape_cast %55 : vector<8xf32> to vector<8x1xf32>
    %cst_29 = arith.constant 3.200000e+01 : f32
    %57 = vector.broadcast %cst_29 : f32 to vector<8x1xf32>
    %58 = arith.divf %56, %57 : vector<8x1xf32>
    %59 = vector.broadcast %58 : vector<8x1xf32> to vector<8x32xf32>
    %60 = arith.subf %52, %59 : vector<8x32xf32>
    %61 = arith.mulf %60, %60 : vector<8x32xf32>
    %cst_30 = arith.constant dense<0.000000e+00> : vector<8xf32>
    %62 = vector.multi_reduction <add>, %61, %cst_30 [1] : vector<8x32xf32> to vector<8xf32>
    %63 = vector.shape_cast %62 : vector<8xf32> to vector<8x1xf32>
    %cst_31 = arith.constant 3.200000e+01 : f32
    %64 = vector.broadcast %cst_31 : f32 to vector<8x1xf32>
    %65 = arith.divf %63, %64 : vector<8x1xf32>
    %66 = vector.broadcast %58 : vector<8x1xf32> to vector<8x32xf32>
    %67 = arith.subf %52, %66 : vector<8x32xf32>
    %cst_32 = arith.constant 9.99999974E-6 : f32
    %68 = vector.broadcast %cst_32 : f32 to vector<8x1xf32>
    %69 = arith.addf %65, %68 : vector<8x1xf32>
    %70 = math.rsqrt %69 : vector<8x1xf32>
    %71 = vector.broadcast %70 : vector<8x1xf32> to vector<8x32xf32>
    %72 = arith.mulf %67, %71 : vector<8x32xf32>
    %73 = vector.broadcast %53 : vector<1x32xf32> to vector<8x32xf32>
    %74 = arith.mulf %72, %73 : vector<8x32xf32>
    %75 = vector.broadcast %54 : vector<1x32xf32> to vector<8x32xf32>
    %76 = arith.addf %74, %75 : vector<8x32xf32>
    %cst_33 = arith.constant 2.000000e+01 : f32
    %77 = vector.broadcast %cst_33 : f32 to vector<8x32xf32>
    %78 = arith.minimumf %76, %77 : vector<8x32xf32>
    %79 = math.exp %78 : vector<8x32xf32>
    %cst_34 = arith.constant 1.000000e+00 : f32
    %80 = vector.broadcast %cst_34 : f32 to vector<8x32xf32>
    %81 = arith.addf %80, %79 : vector<8x32xf32>
    %82 = arith.mulf %81, %81 : vector<8x32xf32>
    %cst_35 = arith.constant 1.000000e+00 : f32
    %83 = vector.broadcast %cst_35 : f32 to vector<8x32xf32>
    %84 = arith.subf %82, %83 : vector<8x32xf32>
    %cst_36 = arith.constant 1.000000e+00 : f32
    %85 = vector.broadcast %cst_36 : f32 to vector<8x32xf32>
    %86 = arith.addf %82, %85 : vector<8x32xf32>
    %87 = tpu.reciprocal %86 {approx = true} : vector<8x32xf32> -> vector<8x32xf32>
    %88 = arith.mulf %84, %87 : vector<8x32xf32>
    %cst_37 = arith.constant 2.000000e+01 : f32
    %89 = vector.broadcast %cst_37 : f32 to vector<8x32xf32>
    %90 = arith.cmpf ogt, %76, %89 : vector<8x32xf32>
    %91 = arith.mulf %76, %88 : vector<8x32xf32>
    %92 = arith.select %90, %76, %91 : vector<8x32xi1>, vector<8x32xf32>
    %c0_38 = arith.constant 0 : index
    %c0_39 = arith.constant 0 : index
    %93 = vector.load %arg10[%c0_38, %c0_39] : memref<32x8xbf16, #tpu.memory_space<vmem>>, vector<32x8xbf16>
    %c0_40 = arith.constant 0 : index
    %c0_41 = arith.constant 0 : index
    %94 = vector.load %arg11[%c0_40, %c0_41] : memref<1x8xf32, #tpu.memory_space<vmem>>, vector<1x8xf32>
    %95 = arith.truncf %92 : vector<8x32xf32> to vector<8x32xbf16>
    %cst_42 = arith.constant dense<0.000000e+00> : vector<8x8xf32>
    %96 = tpu.matmul %95, %93, %cst_42 {dimension_numbers = #tpu.dot_dimension_numbers<[1], [0], [0], [1], [0, 0, 1, 1], [], []>} : vector<8x32xbf16>, vector<32x8xbf16>, vector<8x8xf32> -> vector<8x8xf32>
    %97 = vector.broadcast %94 : vector<1x8xf32> to vector<8x8xf32>
    %98 = arith.addf %96, %97 : vector<8x8xf32>
    %c0_43 = arith.constant 0 : index
    %c0_44 = arith.constant 0 : index
    %99 = vector.load %arg12[%c0_43, %c0_44] : memref<8x8xf32, #tpu.memory_space<vmem>>, vector<8x8xf32>
    tpu.vector_store %arg12[%c0_43, %c0_44], %98 {strides = array<i32>} : memref<8x8xf32, #tpu.memory_space<vmem>>, vector<8x8xf32>,
    return
  }
  func.func @transform_0(%arg0: i32) -> (i32, i32) {
    %c0_i32 = arith.constant 0 : i32
    %c0_i32_0 = arith.constant 0 : i32
    return %arg0, %c0_i32 : i32, i32
  }
  func.func @transform_1(%arg0: i32) -> (i32, i32) {
    %c0_i32 = arith.constant 0 : i32
    %c0_i32_0 = arith.constant 0 : i32
    %c0_i32_1 = arith.constant 0 : i32
    return %c0_i32, %c0_i32_0 : i32, i32
  }
  func.func @transform_2(%arg0: i32) -> (i32, i32) {
    %c0_i32 = arith.constant 0 : i32
    %c0_i32_0 = arith.constant 0 : i32
    %c0_i32_1 = arith.constant 0 : i32
    return %c0_i32, %c0_i32_0 : i32, i32
  }
  func.func @transform_3(%arg0: i32) -> (i32, i32) {
    %c0_i32 = arith.constant 0 : i32
    %c0_i32_0 = arith.constant 0 : i32
    %c0_i32_1 = arith.constant 0 : i32
    return %c0_i32, %c0_i32_0 : i32, i32
  }
  func.func @transform_4(%arg0: i32) -> (i32, i32) {
    %c0_i32 = arith.constant 0 : i32
    %c0_i32_0 = arith.constant 0 : i32
    %c0_i32_1 = arith.constant 0 : i32
    return %c0_i32, %c0_i32_0 : i32, i32
  }
  func.func @transform_5(%arg0: i32) -> (i32, i32) {
    %c0_i32 = arith.constant 0 : i32
    %c0_i32_0 = arith.constant 0 : i32
    %c0_i32_1 = arith.constant 0 : i32
    return %c0_i32, %c0_i32_0 : i32, i32
  }
  func.func @transform_6(%arg0: i32) -> (i32, i32) {
    %c0_i32 = arith.constant 0 : i32
    %c0_i32_0 = arith.constant 0 : i32
    %c0_i32_1 = arith.constant 0 : i32
    return %c0_i32, %c0_i32_0 : i32, i32
  }
  func.func @transform_7(%arg0: i32) -> (i32, i32) {
    %c0_i32 = arith.constant 0 : i32
    %c0_i32_0 = arith.constant 0 : i32
    %c0_i32_1 = arith.constant 0 : i32
    return %c0_i32, %c0_i32_0 : i32, i32
  }
  func.func @transform_8(%arg0: i32) -> (i32, i32) {
    %c0_i32 = arith.constant 0 : i32
    %c0_i32_0 = arith.constant 0 : i32
    %c0_i32_1 = arith.constant 0 : i32
    return %c0_i32, %c0_i32_0 : i32, i32
  }
  func.func @transform_9(%arg0: i32) -> (i32, i32) {
    %c0_i32 = arith.constant 0 : i32
    %c0_i32_0 = arith.constant 0 : i32
    %c0_i32_1 = arith.constant 0 : i32
    return %c0_i32, %c0_i32_0 : i32, i32
  }
  func.func @transform_10(%arg0: i32) -> (i32, i32) {
    %c0_i32 = arith.constant 0 : i32
    %c0_i32_0 = arith.constant 0 : i32
    %c0_i32_1 = arith.constant 0 : i32
    return %c0_i32, %c0_i32_0 : i32, i32
  }
  func.func @transform_11(%arg0: i32) -> (i32, i32) {
    %c0_i32 = arith.constant 0 : i32
    %c0_i32_0 = arith.constant 0 : i32
    return %arg0, %c0_i32 : i32, i32
  }
}

</mosaic_0001>

<llo_original>
// kernel: tpu_custom_call.1
$region0: #{tpu_custom_call.1}
  #allocation0 [shape = 'u32[]', space=smem, size = 0x4, offset = 0x4, fixed_abs, tag = 'smem constant byte address 0x4 - core index']
  #allocation1 [shape = 'u32[144,128]{1,0:T(1,128)}', space=vmem, size = 0x12000, scoped, tag = 'internal scratch']
  %s0 = inlined_call_operand.vmem [shape: f32[16,16], index: 0, kind: input, shape index: {}]
  %s1 = inlined_call_operand.hbm [shape: bf16[16,32], index: 1, kind: input, shape index: {}]
  %s2 = inlined_call_operand.vmem [shape: f32[1,32], index: 2, kind: input, shape index: {}]
  %s3 = inlined_call_operand.vmem [shape: f32[1,32], index: 3, kind: input, shape index: {}]
  %s4 = inlined_call_operand.hbm [shape: f32[1,32], index: 4, kind: input, shape index: {}]
  %s5 = inlined_call_operand.vmem [shape: bf16[32,32], index: 5, kind: input, shape index: {}]
  %s6 = inlined_call_operand.vmem [shape: f32[1,32], index: 6, kind: input, shape index: {}]
  %s7 = inlined_call_operand.vmem [shape: f32[1,32], index: 7, kind: input, shape index: {}]
  %s8 = inlined_call_operand.vmem [shape: f32[1,32], index: 8, kind: input, shape index: {}]
  %s9 = inlined_call_operand.vmem [shape: bf16[32,8], index: 9, kind: input, shape index: {}]
  %s10 = inlined_call_operand.vmem [shape: f32[1,8], index: 10, kind: input, shape index: {}]
  %s11 = inlined_call_operand.vmem [shape: f32[16,8], index: 11, kind: output, shape index: {}]
  %s12 = sld [smem:[#allocation0]]
  $region85: #{tpu_custom_call.1} parent=0
    _
  %s14 = ssub.s32 1, %s12
  %s15 = scalar_select 0, %s14, %s12
  $region1: #{tpu_custom_call.1} parent=0
    #allocation2 [shape = 'u8[4096]{0}', space=vmem, size = 0x1000, scoped, tag = 'input window, operand 1, single buffered']
    #allocation3 [shape = 's32[2]{0}', space=sflag, size = 0x8, scoped, tag = 'scoped memory for tpu_custom_call.1']
    #allocation4 [shape = 'u8[512]{0}', space=vmem, size = 0x400, scoped, tag = 'input window, operand 4, single buffered']
    #allocation5 [shape = 's32[1]{0}', space=sflag, size = 0x4, scoped, tag = 'scoped memory for tpu_custom_call.1']
    %16 = vsyncpa [#allocation3], 0
    %17 = vsyncpa [#allocation5], 0
    loop: start=0, step=1, limit=4
    $region2: #{tpu_custom_call.1} parent=1 // loop_pre_header
      _
    $region3: #{tpu_custom_call.1} parent=1 // loop_header
      %s19 = sphi 0, %s23
      %p20 = scmp.ge.s32.totalorder %s19, 4
      %s29 = sphi 0, %s31
      %s32 = sphi 0, %s29
      %s33 = sphi 0, %s32
      %s49 = sphi 0, %s33
      %s53 = sphi 0, %s53
      %s55 = sphi 0, %s53
      %s56 = sphi 0, %s55
      %s70 = sphi 0, %s56
      %s74 = sphi 0, %s74
      %s76 = sphi 0, %s74
      %s77 = sphi 0, %s76
      %s91 = sphi 0, %s77
      %s95 = sphi 0, %s95
      %s97 = sphi 0, %s95
      %s98 = sphi 0, %s97
      %s112 = sphi 0, %s98
      %s116 = sphi 0, %s116
      %s118 = sphi 0, %s116
      %s119 = sphi 0, %s118
      %s133 = sphi 0, %s119
      %s137 = sphi 0, %s137
      %s139 = sphi 0, %s137
      %s140 = sphi 0, %s139
      %s154 = sphi 0, %s140
      %s158 = sphi 0, %s158
      %s160 = sphi 0, %s158
      %s161 = sphi 0, %s160
      %s175 = sphi 0, %s161
      %s179 = sphi 0, %s179
      %s181 = sphi 0, %s179
      %s182 = sphi 0, %s181
      %s196 = sphi 0, %s182
      %s200 = sphi 0, %s200
      %s202 = sphi 0, %s200
      %s203 = sphi 0, %s202
      %s217 = sphi 0, %s203
      %s221 = sphi 0, %s221
      %s223 = sphi 0, %s221
      %s224 = sphi 0, %s223
      %s238 = sphi 0, %s224
      %s242 = sphi 0, %s242
      %s244 = sphi 0, %s242
      %s245 = sphi 0, %s244
      %s259 = sphi 0, %s245
      %s265 = sphi 0, %s267
      %s268 = sphi 0, %s265
      %s269 = sphi 0, %s268
      %s285 = sphi 0, %s269
    $region4: #{tpu_custom_call.1} parent=1 // loop_header_branch
      %22 = sbr.rel (%p20) target = $region8
    $region5: #{tpu_custom_call.1} parent=1 // loop_body
      %s24 = ssub.s32 %s19, 1
      %s25 = ssub.s32 %s19, 2
      %s26 = sadd.s32 %s19, 1
      %s27 = ssub.s32 %s19, %s26
      %p28 = scmp.eq.s32.totalorder %s27, 0
      %s30 = sadd.s32 %s29, 1
      %s31 = scalar_select %p28, %s29, %s30
      %p34 = pneg %p28
      %p35 = scmp.eq.s32.totalorder %s19, 1
      %p36 = por %p34, %p35
      %p37 = scmp.ne.s32.totalorder %s29, %s32
      %p38 = scmp.eq.s32.totalorder %s19, 0
      %p39 = por %p37, %p38
      %p40 = scmp.ne.s32.totalorder %s29, %s32
      %p41 = scmp.eq.s32.totalorder %s24, 1
      %p42 = por %p40, %p41
      %p43 = scmp.ne.s32.totalorder %s32, %s33
      %p44 = scmp.eq.s32.totalorder %s24, 0
      %p45 = por %p43, %p44
      %p46 = scmp.ne.s32.totalorder %s32, %s33
      %p47 = scmp.eq.s32.totalorder %s25, 1
      %p48 = por %p46, %p47
      %p50 = scmp.ne.s32.totalorder %s33, %s49
      %p51 = scmp.eq.s32.totalorder %s25, 0
      %p52 = por %p50, %p51
      %s54 = sadd.s32 %s53, 1
      %p57 = scmp.eq.s32.totalorder %s19, 1
      %p58 = scmp.ne.s32.totalorder %s53, %s55
      %p59 = scmp.eq.s32.totalorder %s19, 0
      %p60 = por %p58, %p59
      %p61 = scmp.ne.s32.totalorder %s53, %s55
      %p62 = scmp.eq.s32.totalorder %s24, 1
      %p63 = por %p61, %p62
      %p64 = scmp.ne.s32.totalorder %s55, %s56
      %p65 = scmp.eq.s32.totalorder %s24, 0
      %p66 = por %p64, %p65
      %p67 = scmp.ne.s32.totalorder %s55, %s56
      %p68 = scmp.eq.s32.totalorder %s25, 1
      %p69 = por %p67, %p68
      %p71 = scmp.ne.s32.totalorder %s56, %s70
      %p72 = scmp.eq.s32.totalorder %s25, 0
      %p73 = por %p71, %p72
      %s75 = sadd.s32 %s74, 1
      %p78 = scmp.eq.s32.totalorder %s19, 1
      %p79 = scmp.ne.s32.totalorder %s74, %s76
      %p80 = scmp.eq.s32.totalorder %s19, 0
      %p81 = por %p79, %p80
      %p82 = scmp.ne.s32.totalorder %s74, %s76
      %p83 = scmp.eq.s32.totalorder %s24, 1
      %p84 = por %p82, %p83
      %p85 = scmp.ne.s32.totalorder %s76, %s77
      %p86 = scmp.eq.s32.totalorder %s24, 0
      %p87 = por %p85, %p86
      %p88 = scmp.ne.s32.totalorder %s76, %s77
      %p89 = scmp.eq.s32.totalorder %s25, 1
      %p90 = por %p88, %p89
      %p92 = scmp.ne.s32.totalorder %s77, %s91
      %p93 = scmp.eq.s32.totalorder %s25, 0
      %p94 = por %p92, %p93
      %s96 = sadd.s32 %s95, 1
      %p99 = scmp.eq.s32.totalorder %s19, 1
      %p100 = scmp.ne.s32.totalorder %s95, %s97
      %p101 = scmp.eq.s32.totalorder %s19, 0
      %p102 = por %p100, %p101
      %p103 = scmp.ne.s32.totalorder %s95, %s97
      %p104 = scmp.eq.s32.totalorder %s24, 1
      %p105 = por %p103, %p104
      %p106 = scmp.ne.s32.totalorder %s97, %s98
      %p107 = scmp.eq.s32.totalorder %s24, 0
      %p108 = por %p106, %p107
      %p109 = scmp.ne.s32.totalorder %s97, %s98
      %p110 = scmp.eq.s32.totalorder %s25, 1
      %p111 = por %p109, %p110
      %p113 = scmp.ne.s32.totalorder %s98, %s112
      %p114 = scmp.eq.s32.totalorder %s25, 0
      %p115 = por %p113, %p114
      %s117 = sadd.s32 %s116, 1
      %p120 = scmp.eq.s32.totalorder %s19, 1
      %p121 = scmp.ne.s32.totalorder %s116, %s118
      %p122 = scmp.eq.s32.totalorder %s19, 0
      %p123 = por %p121, %p122
      %p124 = scmp.ne.s32.totalorder %s116, %s118
      %p125 = scmp.eq.s32.totalorder %s24, 1
      %p126 = por %p124, %p125
      %p127 = scmp.ne.s32.totalorder %s118, %s119
      %p128 = scmp.eq.s32.totalorder %s24, 0
      %p129 = por %p127, %p128
      %p130 = scmp.ne.s32.totalorder %s118, %s119
      %p131 = scmp.eq.s32.totalorder %s25, 1
      %p132 = por %p130, %p131
      %p134 = scmp.ne.s32.totalorder %s119, %s133
      %p135 = scmp.eq.s32.totalorder %s25, 0
      %p136 = por %p134, %p135
      %s138 = sadd.s32 %s137, 1
      %p141 = scmp.eq.s32.totalorder %s19, 1
      %p142 = scmp.ne.s32.totalorder %s137, %s139
      %p143 = scmp.eq.s32.totalorder %s19, 0
      %p144 = por %p142, %p143
      %p145 = scmp.ne.s32.totalorder %s137, %s139
      %p146 = scmp.eq.s32.totalorder %s24, 1
      %p147 = por %p145, %p146
      %p148 = scmp.ne.s32.totalorder %s139, %s140
      %p149 = scmp.eq.s32.totalorder %s24, 0
      %p150 = por %p148, %p149
      %p151 = scmp.ne.s32.totalorder %s139, %s140
      %p152 = scmp.eq.s32.totalorder %s25, 1
      %p153 = por %p151, %p152
      %p155 = scmp.ne.s32.totalorder %s140, %s154
      %p156 = scmp.eq.s32.totalorder %s25, 0
      %p157 = por %p155, %p156
      %s159 = sadd.s32 %s158, 1
      %p162 = scmp.eq.s32.totalorder %s19, 1
      %p163 = scmp.ne.s32.totalorder %s158, %s160
      %p164 = scmp.eq.s32.totalorder %s19, 0
      %p165 = por %p163, %p164
      %p166 = scmp.ne.s32.totalorder %s158, %s160
      %p167 = scmp.eq.s32.totalorder %s24, 1
      %p168 = por %p166, %p167
      %p169 = scmp.ne.s32.totalorder %s160, %s161
      %p170 = scmp.eq.s32.totalorder %s24, 0
      %p171 = por %p169, %p170
      %p172 = scmp.ne.s32.totalorder %s160, %s161
      %p173 = scmp.eq.s32.totalorder %s25, 1
      %p174 = por %p172, %p173
      %p176 = scmp.ne.s32.totalorder %s161, %s175
      %p177 = scmp.eq.s32.totalorder %s25, 0
      %p178 = por %p176, %p177
      %s180 = sadd.s32 %s179, 1
      %p183 = scmp.eq.s32.totalorder %s19, 1
      %p184 = scmp.ne.s32.totalorder %s179, %s181
      %p185 = scmp.eq.s32.totalorder %s19, 0
      %p186 = por %p184, %p185
      %p187 = scmp.ne.s32.totalorder %s179, %s181
      %p188 = scmp.eq.s32.totalorder %s24, 1
      %p189 = por %p187, %p188
      %p190 = scmp.ne.s32.totalorder %s181, %s182
      %p191 = scmp.eq.s32.totalorder %s24, 0
      %p192 = por %p190, %p191
      %p193 = scmp.ne.s32.totalorder %s181, %s182
      %p194 = scmp.eq.s32.totalorder %s25, 1
      %p195 = por %p193, %p194
      %p197 = scmp.ne.s32.totalorder %s182, %s196
      %p198 = scmp.eq.s32.totalorder %s25, 0
      %p199 = por %p197, %p198
      %s201 = sadd.s32 %s200, 1
      %p204 = scmp.eq.s32.totalorder %s19, 1
      %p205 = scmp.ne.s32.totalorder %s200, %s202
      %p206 = scmp.eq.s32.totalorder %s19, 0
      %p207 = por %p205, %p206
      %p208 = scmp.ne.s32.totalorder %s200, %s202
      %p209 = scmp.eq.s32.totalorder %s24, 1
      %p210 = por %p208, %p209
      %p211 = scmp.ne.s32.totalorder %s202, %s203
      %p212 = scmp.eq.s32.totalorder %s24, 0
      %p213 = por %p211, %p212
      %p214 = scmp.ne.s32.totalorder %s202, %s203
      %p215 = scmp.eq.s32.totalorder %s25, 1
      %p216 = por %p214, %p215
      %p218 = scmp.ne.s32.totalorder %s203, %s217
      %p219 = scmp.eq.s32.totalorder %s25, 0
      %p220 = por %p218, %p219
      %s222 = sadd.s32 %s221, 1
      %p225 = scmp.eq.s32.totalorder %s19, 1
      %p226 = scmp.ne.s32.totalorder %s221, %s223
      %p227 = scmp.eq.s32.totalorder %s19, 0
      %p228 = por %p226, %p227
      %p229 = scmp.ne.s32.totalorder %s221, %s223
      %p230 = scmp.eq.s32.totalorder %s24, 1
      %p231 = por %p229, %p230
      %p232 = scmp.ne.s32.totalorder %s223, %s224
      %p233 = scmp.eq.s32.totalorder %s24, 0
      %p234 = por %p232, %p233
      %p235 = scmp.ne.s32.totalorder %s223, %s224
      %p236 = scmp.eq.s32.totalorder %s25, 1
      %p237 = por %p235, %p236
      %p239 = scmp.ne.s32.totalorder %s224, %s238
      %p240 = scmp.eq.s32.totalorder %s25, 0
      %p241 = por %p239, %p240
      %s243 = sadd.s32 %s242, 1
      %p246 = scmp.eq.s32.totalorder %s19, 1
      %p247 = scmp.ne.s32.totalorder %s242, %s244
      %p248 = scmp.eq.s32.totalorder %s19, 0
      %p249 = por %p247, %p248
      %p250 = scmp.ne.s32.totalorder %s242, %s244
      %p251 = scmp.eq.s32.totalorder %s24, 1
      %p252 = por %p250, %p251
      %p253 = scmp.ne.s32.totalorder %s244, %s245
      %p254 = scmp.eq.s32.totalorder %s24, 0
      %p255 = por %p253, %p254
      %p256 = scmp.ne.s32.totalorder %s244, %s245
      %p257 = scmp.eq.s32.totalorder %s25, 1
      %p258 = por %p256, %p257
      %p260 = scmp.ne.s32.totalorder %s245, %s259
      %p261 = scmp.eq.s32.totalorder %s25, 0
      %p262 = por %p260, %p261
      %s263 = ssub.s32 %s19, %s26
      %p264 = scmp.eq.s32.totalorder %s263, 0
      %s266 = sadd.s32 %s265, 1
      %s267 = scalar_select %p264, %s265, %s266
      %p270 = pneg %p264
      %p271 = scmp.eq.s32.totalorder %s19, 1
      %p272 = por %p270, %p271
      %p273 = scmp.ne.s32.totalorder %s265, %s268
      %p274 = scmp.eq.s32.totalorder %s19, 0
      %p275 = por %p273, %p274
      %p276 = scmp.ne.s32.totalorder %s265, %s268
      %p277 = scmp.eq.s32.totalorder %s24, 1
      %p278 = por %p276, %p277
      %p279 = scmp.ne.s32.totalorder %s268, %s269
      %p280 = scmp.eq.s32.totalorder %s24, 0
      %p281 = por %p279, %p280
      %p282 = scmp.ne.s32.totalorder %s268, %s269
      %p283 = scmp.eq.s32.totalorder %s25, 1
      %p284 = por %p282, %p283
      %p286 = scmp.ne.s32.totalorder %s269, %s285
      %p287 = scmp.eq.s32.totalorder %s25, 0
      %p288 = por %p286, %p287
      %p289 = scmp.le.s32.totalorder 1, %s19
      %p290 = scmp.lt.s32.totalorder %s19, 3
      %p291 = pnand %p289, %p290
      %p292 = pneg %p291
      // Predicated region
      $region9: #{tpu_custom_call.1} parent=5 // pred_check
        _
      $region10: #{tpu_custom_call.1} parent=5 // pred_check_branch
        %294 = sbr.rel (%p291) target = $region12
      $region11: #{tpu_custom_call.1} parent=5 // pred_region
        %s295 = ssub.s32 %s19, 1
        // Predicated region
        $region13: #{tpu_custom_call.1} parent=11 // pred_check
          %p296 = pneg %p66
        $region14: #{tpu_custom_call.1} parent=11 // pred_check_branch
          %298 = sbr.rel (%p296) target = $region16
        $region15: #{tpu_custom_call.1} parent=11 // pred_region
          %s300 = ssub.s32 128, 128
          %301 = vsyncadd [#allocation3], %s300
          %s302 = sshll.u32 [#allocation2], 4
          %s303 = int_to_ptr.vmem [resolvable:$true] %s302
          %308 = dma.hbm_to_vmem [thread:$0]  %s1, 128, %s303, [#allocation3], 64, 64, 4
        $region16: #{tpu_custom_call.1} parent=11 // pred_fallthru
          _
        // Predicated region
        $region17: #{tpu_custom_call.1} parent=11 // pred_check
          %p309 = pneg %p87
        $region18: #{tpu_custom_call.1} parent=11 // pred_check_branch
          %311 = sbr.rel (%p309) target = $region20
        $region19: #{tpu_custom_call.1} parent=11 // pred_region
          _
        $region20: #{tpu_custom_call.1} parent=11 // pred_fallthru
          _
        // Predicated region
        $region21: #{tpu_custom_call.1} parent=11 // pred_check
          %p312 = pneg %p108
        $region22: #{tpu_custom_call.1} parent=11 // pred_check_branch
          %314 = sbr.rel (%p312) target = $region24
        $region23: #{tpu_custom_call.1} parent=11 // pred_region
          _
        $region24: #{tpu_custom_call.1} parent=11 // pred_fallthru
          _
        // Predicated region
        $region25: #{tpu_custom_call.1} parent=11 // pred_check
          %p315 = pneg %p129
        $region26: #{tpu_custom_call.1} parent=11 // pred_check_branch
          %317 = sbr.rel (%p315) target = $region28
        $region27: #{tpu_custom_call.1} parent=11 // pred_region
          %s319 = ssub.s32 16, 16
          %320 = vsyncadd [#allocation5], %s319
          %s322 = sshll.u32 [#allocation4], 4
          %s323 = int_to_ptr.vmem [resolvable:$true] %s322
          %325 = dma.hbm_to_vmem [thread:$0]  %s4, 16, %s323, [#allocation5]
        $region28: #{tpu_custom_call.1} parent=11 // pred_fallthru
          _
        // Predicated region
        $region29: #{tpu_custom_call.1} parent=11 // pred_check
          %p326 = pneg %p150
        $region30: #{tpu_custom_call.1} parent=11 // pred_check_branch
          %328 = sbr.rel (%p326) target = $region32
        $region31: #{tpu_custom_call.1} parent=11 // pred_region
          _
        $region32: #{tpu_custom_call.1} parent=11 // pred_fallthru
          _
        // Predicated region
        $region33: #{tpu_custom_call.1} parent=11 // pred_check
          %p329 = pneg %p171
        $region34: #{tpu_custom_call.1} parent=11 // pred_check_branch
          %331 = sbr.rel (%p329) target = $region36
        $region35: #{tpu_custom_call.1} parent=11 // pred_region
          _
        $region36: #{tpu_custom_call.1} parent=11 // pred_fallthru
          _
        // Predicated region
        $region37: #{tpu_custom_call.1} parent=11 // pred_check
          %p332 = pneg %p192
        $region38: #{tpu_custom_call.1} parent=11 // pred_check_branch
          %334 = sbr.rel (%p332) target = $region40
        $region39: #{tpu_custom_call.1} parent=11 // pred_region
          _
        $region40: #{tpu_custom_call.1} parent=11 // pred_fallthru
          _
        // Predicated region
        $region41: #{tpu_custom_call.1} parent=11 // pred_check
          %p335 = pneg %p213
        $region42: #{tpu_custom_call.1} parent=11 // pred_check_branch
          %337 = sbr.rel (%p335) target = $region44
        $region43: #{tpu_custom_call.1} parent=11 // pred_region
          _
        $region44: #{tpu_custom_call.1} parent=11 // pred_fallthru
          _
        // Predicated region
        $region45: #{tpu_custom_call.1} parent=11 // pred_check
          %p338 = pneg %p234
        $region46: #{tpu_custom_call.1} parent=11 // pred_check_branch
          %340 = sbr.rel (%p338) target = $region48
        $region47: #{tpu_custom_call.1} parent=11 // pred_region
          _
        $region48: #{tpu_custom_call.1} parent=11 // pred_fallthru
          _
        // Predicated region
        $region49: #{tpu_custom_call.1} parent=11 // pred_check
          %p341 = pneg %p255
        $region50: #{tpu_custom_call.1} parent=11 // pred_check_branch
          %343 = sbr.rel (%p341) target = $region52
        $region51: #{tpu_custom_call.1} parent=11 // pred_region
          _
        $region52: #{tpu_custom_call.1} parent=11 // pred_fallthru
          _
      $region12: #{tpu_custom_call.1} parent=5 // pred_fallthru
        _
      %p344 = scmp.lt.s32.totalorder %s19, 2
      // Predicated region
      $region53: #{tpu_custom_call.1} parent=5 // pred_check
        %p345 = pneg %p344
      $region54: #{tpu_custom_call.1} parent=5 // pred_check_branch
        %347 = sbr.rel (%p345) target = $region56
      $region55: #{tpu_custom_call.1} parent=5 // pred_region
        // Predicated region
        $region57: #{tpu_custom_call.1} parent=55 // pred_check
          %p348 = pneg %p39
        $region58: #{tpu_custom_call.1} parent=55 // pred_check_branch
          %350 = sbr.rel (%p348) target = $region60
        $region59: #{tpu_custom_call.1} parent=55 // pred_region
          %p351 = scmp.lt.s32.totalorder %s19, 1
          %s352 = scalar_select %p351, %s19, 1
          %s353 = smul.addr %s352, 8
          %s354 = scalar_lea.vmem %s0, %s353
        $region60: #{tpu_custom_call.1} parent=55 // pred_fallthru
          _
      $region56: #{tpu_custom_call.1} parent=5 // pred_fallthru
        _
      %p355 = scmp.le.s32.totalorder 1, %s19
      %p356 = scmp.lt.s32.totalorder %s19, 3
      %p357 = pnand %p355, %p356
      %p358 = pneg %p357
      // Predicated region
      $region61: #{tpu_custom_call.1} parent=5 // pred_check
        _
      $region62: #{tpu_custom_call.1} parent=5 // pred_check_branch
        %360 = sbr.rel (%p357) target = $region64
      $region63: #{tpu_custom_call.1} parent=5 // pred_region
        %s361 = ssub.s32 %s19, 1
        // Predicated region
        $region65: #{tpu_custom_call.1} parent=63 // pred_check
          %p362 = pneg %p66
        $region66: #{tpu_custom_call.1} parent=63 // pred_check_branch
          %364 = sbr.rel (%p362) target = $region68
        $region67: #{tpu_custom_call.1} parent=63 // pred_region
          %365 = dma.done [#allocation3], 128
        $region68: #{tpu_custom_call.1} parent=63 // pred_fallthru
          _
        // Predicated region
        $region69: #{tpu_custom_call.1} parent=63 // pred_check
          %p366 = pneg %p129
        $region70: #{tpu_custom_call.1} parent=63 // pred_check_branch
          %368 = sbr.rel (%p366) target = $region72
        $region71: #{tpu_custom_call.1} parent=63 // pred_region
          %369 = dma.done [#allocation5], 16
        $region72: #{tpu_custom_call.1} parent=63 // pred_fallthru
          _
        %p370 = scmp.lt.s32.totalorder %s24, 1
        %s371 = scalar_select %p370, %s24, 1
        %s372 = smul.addr %s371, 8
        %s373 = scalar_lea.vmem %s0, %s372
        %p374 = pneg %p45
        %p375 = pneg %p42
        %p376 = pneg %p66
        %p377 = pneg %p63
        %p378 = pneg %p87
        %p379 = pneg %p84
        %p380 = pneg %p108
        %p381 = pneg %p105
        %p382 = pneg %p129
        %p383 = pneg %p126
        %p384 = pneg %p150
        %p385 = pneg %p147
        %p386 = pneg %p171
        %p387 = pneg %p168
        %p388 = pneg %p192
        %p389 = pneg %p189
        %p390 = pneg %p213
        %p391 = pneg %p210
        %p392 = pneg %p234
        %p393 = pneg %p231
        %p394 = pneg %p255
        %p395 = pneg %p252
        %p396 = pneg %p281
        %p397 = pneg %p278
        %p398 = scmp.lt.s32.totalorder %s24, 1
        %s399 = scalar_select %p398, %s24, 1
        %s400 = smul.addr %s399, 8
        %s401 = scalar_lea.vmem %s11, %s400
        %p402 = scmp.lt.s32.totalorder %s24, 1
        %s403 = scalar_select %p402, %s24, 1
        %s404 = smul.addr %s403, 8
        %s405 = scalar_lea.vmem %s0, %s404
        %p406 = scmp.lt.s32.totalorder %s24, 1
        %s407 = scalar_select %p406, %s24, 1
        %s408 = smul.addr %s407, 8
        %s409 = scalar_lea.vmem %s11, %s408
        %v411 = vld [vmem:[%s405] sm:$0xff]
        %v412 = vld [vmem:[#allocation2] sm:$0xf]
        %v413 = vld [vmem:[#allocation2 + $0x4] sm:$0xf]
        %v414 = vld [vmem:[%s2] sm:$0x1]
        %v415 = vpack.c.bf16 %v411, %v411
        %v417 = vlaneseq
        %v418 = vshrl.u32 %v417, 7
        %v419 = vsub.s32 0, %v418
        %v420 = vrot.slane %v414, %v419
        %v424 = vunpack.c.l.b16 %v412
        %v425 = vunpack.c.l.b16 %v413
        %v426 = vpack.c.b16 %v425, %v424
        %vm428 = vcmask 130048
        %v430 = vsel %vm428, %v415, 0
        %432 = vmatprep.subr.bf16.mxu0 0
        %433 = vmatpush1.bf16.msra.mxu0 %v426
        %434 = vmatprep.subr.bf16.mxu0 0
        %435 = vmatpush1.bf16.msra.mxu0 0
        %436 = vmatprep.subr.bf16.mxu0 0
        %437 = vmatpush1.bf16.msra.mxu0 0
        %438 = vmatprep.subr.bf16.mxu0 0
        %439 = vmatpush1.bf16.msra.mxu0 0
        %440 = vmatprep.subr.bf16.mxu0 0
        %441 = vmatpush1.bf16.msra.mxu0 0
        %442 = vmatprep.subr.bf16.mxu0 0
        %443 = vmatpush1.bf16.msra.mxu0 0
        %444 = vmatprep.subr.bf16.mxu0 0
        %445 = vmatpush1.bf16.msra.mxu0 0
        %446 = vmatprep.subr.bf16.mxu0 0
        %447 = vmatpush1.bf16.msra.mxu0 0
        %448 = vmatprep.subr.bf16.mxu0 0
        %449 = vmatpush1.bf16.msra.mxu0 0
        %450 = vmatprep.subr.bf16.mxu0 0
        %451 = vmatpush1.bf16.msra.mxu0 0
        %452 = vmatprep.subr.bf16.mxu0 0
        %453 = vmatpush1.bf16.msra.mxu0 0
        %454 = vmatprep.subr.bf16.mxu0 0
        %455 = vmatpush1.bf16.msra.mxu0 0
        %456 = vmatprep.subr.bf16.mxu0 0
        %457 = vmatpush1.bf16.msra.mxu0 0
        %458 = vmatprep.subr.bf16.mxu0 0
        %459 = vmatpush1.bf16.msra.mxu0 0
        %460 = vmatprep.subr.bf16.mxu0 0
        %461 = vmatpush1.bf16.msra.mxu0 0
        %462 = vmatprep.subr.bf16.mxu0 0
        %463 = vmatpush1.bf16.msra.mxu0 0
        %464 = vmatprep.mubr.bf16.mxu0 0
        %465 = vmatmul.mubr.bf16.gmra.mrb[0].mxu0 %v430
        %v466 = vpop.f32.mrb[0].mxu0
        %v467 = vadd.f32 %v420, %v466
        %v468 = vpop.f32.mrb[0].mxu0
        %v469 = vpop.f32.mrb[0].mxu0
        %v470 = vpop.f32.mrb[0].mxu0
        %471 = vdwg.mxu0
        %v472 = vld [vmem:[%s3] sm:$0x1]
        %v473 = vld [vmem:[#allocation4] sm:$0x1]
        %vm474 = vcmask 261120
        %v475 = vsel %vm474, %v467, 0.0
        %476 = vadd.xlane.f32.xlu0 %v475
        %v477 = vpop.xlane.xlu0 %476
        %v478 = vrcp.pop 32.0
        %v479 = vmul.f32 %v477, %v478
        %v480 = vsub.f32 %v467, %v479
        %v481 = vmul.f32 %v480, %v480
        %v482 = vsel %vm474, %v481, 0.0
        %483 = vadd.xlane.f32.xlu0 %v482
        %v484 = vpop.xlane.xlu0 %483
        %v485 = vmul.f32 %v484, %v478
        %v486 = vadd.f32 %v485, 1e-05
        %v487 = vrsqrt.pop %v486
        %v488 = vmul.f32 %v480, %v487
        %v490 = vlaneseq
        %v491 = vshrl.u32 %v490, 7
        %v492 = vsub.s32 0, %v491
        %v493 = vrot.slane %v472, %v492
        %v495 = vmul.f32 %v488, %v493
        %v497 = vlaneseq
        %v498 = vshrl.u32 %v497, 7
        %v499 = vsub.s32 0, %v498
        %v500 = vrot.slane %v473, %v499
        %v502 = vadd.f32 %v495, %v500
        %v503 = vmin.f32 %v502, 20.0
        %v504 = vmul.f32 %v503, 1.442695
        %v505 = vpow.pop %v504
        %v506 = vadd.f32 %v505, 1.0
        %v507 = vmul.f32 %v506, %v506
        %v508 = vsub.f32 %v507, 1.0
        %v509 = vadd.f32 %v507, 1.0
        %v510 = vrcp.pop %v509
        %v511 = vmul.f32 %v508, %v510
        %vm512 = vcmp.gt.f32.partialorder %v502, 20.0
        %v513 = vmul.f32 %v502, %v511
        %v514 = vsel %vm512, %v502, %v513
        %v515 = vld [vmem:[%s5] sm:$0xf]
        %v516 = vld [vmem:[%s5 + $0x4] sm:$0xf]
        %v517 = vld [vmem:[%s5 + $0x8] sm:$0xf]
        %v518 = vld [vmem:[%s5 + $0xc] sm:$0xf]
        %v519 = vld [vmem:[%s6] sm:$0x1]
        %v520 = vpack.c.bf16 %v514, %v514
        %v522 = vlaneseq
        %v523 = vshrl.u32 %v522, 7
        %v524 = vsub.s32 0, %v523
        %v525 = vrot.slane %v519, %v524
        %v531 = vunpack.c.l.b16 %v515
        %v532 = vunpack.c.l.b16 %v516
        %v533 = vunpack.c.l.b16 %v517
        %v534 = vunpack.c.l.b16 %v518
        %v535 = vpack.c.b16 %v532, %v531
        %v536 = vpack.c.b16 %v534, %v533
        %v540 = vsel %vm474, %v520, 0
        %542 = vmatprep.subr.bf16.mxu0 0
        %543 = vmatpush1.bf16.msra.mxu0 %v535
        %544 = vmatprep.subr.bf16.mxu0 0
        %545 = vmatpush1.bf16.msra.mxu0 %v536
        %546 = vmatprep.subr.bf16.mxu0 0
        %547 = vmatpush1.bf16.msra.mxu0 0
        %548 = vmatprep.subr.bf16.mxu0 0
        %549 = vmatpush1.bf16.msra.mxu0 0
        %550 = vmatprep.subr.bf16.mxu0 0
        %551 = vmatpush1.bf16.msra.mxu0 0
        %552 = vmatprep.subr.bf16.mxu0 0
        %553 = vmatpush1.bf16.msra.mxu0 0
        %554 = vmatprep.subr.bf16.mxu0 0
        %555 = vmatpush1.bf16.msra.mxu0 0
        %556 = vmatprep.subr.bf16.mxu0 0
        %557 = vmatpush1.bf16.msra.mxu0 0
        %558 = vmatprep.subr.bf16.mxu0 0
        %559 = vmatpush1.bf16.msra.mxu0 0
        %560 = vmatprep.subr.bf16.mxu0 0
        %561 = vmatpush1.bf16.msra.mxu0 0
        %562 = vmatprep.subr.bf16.mxu0 0
        %563 = vmatpush1.bf16.msra.mxu0 0
        %564 = vmatprep.subr.bf16.mxu0 0
        %565 = vmatpush1.bf16.msra.mxu0 0
        %566 = vmatprep.subr.bf16.mxu0 0
        %567 = vmatpush1.bf16.msra.mxu0 0
        %568 = vmatprep.subr.bf16.mxu0 0
        %569 = vmatpush1.bf16.msra.mxu0 0
        %570 = vmatprep.subr.bf16.mxu0 0
        %571 = vmatpush1.bf16.msra.mxu0 0
        %572 = vmatprep.subr.bf16.mxu0 0
        %573 = vmatpush1.bf16.msra.mxu0 0
        %574 = vmatprep.mubr.bf16.mxu0 0
        %575 = vmatmul.mubr.bf16.gmra.mrb[0].mxu0 %v540
        %v576 = vpop.f32.mrb[0].mxu0
        %v577 = vadd.f32 %v525, %v576
        %v578 = vpop.f32.mrb[0].mxu0
        %v579 = vpop.f32.mrb[0].mxu0
        %v580 = vpop.f32.mrb[0].mxu0
        %581 = vdwg.mxu0
        %v582 = vld [vmem:[%s7] sm:$0x1]
        %v583 = vld [vmem:[%s8] sm:$0x1]
        %v584 = vsel %vm474, %v577, 0.0
        %585 = vadd.xlane.f32.xlu0 %v584
        %v586 = vpop.xlane.xlu0 %585
        %v587 = vmul.f32 %v586, %v478
        %v588 = vsub.f32 %v577, %v587
        %v589 = vmul.f32 %v588, %v588
        %v590 = vsel %vm474, %v589, 0.0
        %591 = vadd.xlane.f32.xlu0 %v590
        %v592 = vpop.xlane.xlu0 %591
        %v593 = vmul.f32 %v592, %v478
        %v594 = vadd.f32 %v593, 1e-05
        %v595 = vrsqrt.pop %v594
        %v596 = vmul.f32 %v588, %v595
        %v598 = vlaneseq
        %v599 = vshrl.u32 %v598, 7
        %v600 = vsub.s32 0, %v599
        %v601 = vrot.slane %v582, %v600
        %v603 = vmul.f32 %v596, %v601
        %v605 = vlaneseq
        %v606 = vshrl.u32 %v605, 7
        %v607 = vsub.s32 0, %v606
        %v608 = vrot.slane %v583, %v607
        %v610 = vadd.f32 %v603, %v608
        %v611 = vmin.f32 %v610, 20.0
        %v612 = vmul.f32 %v611, 1.442695
        %v613 = vpow.pop %v612
        %v614 = vadd.f32 %v613, 1.0
        %v615 = vmul.f32 %v614, %v614
        %v616 = vsub.f32 %v615, 1.0
        %v617 = vadd.f32 %v615, 1.0
        %v618 = vrcp.pop %v617
        %v619 = vmul.f32 %v616, %v618
        %vm620 = vcmp.gt.f32.partialorder %v610, 20.0
        %v621 = vmul.f32 %v610, %v619
        %v622 = vsel %vm620, %v610, %v621
        %v623 = vld [vmem:[%s9] sm:$0xf]
        %v624 = vld [vmem:[%s9 + $0x4] sm:$0xf]
        %v625 = vld [vmem:[%s9 + $0x8] sm:$0xf]
        %v626 = vld [vmem:[%s9 + $0xc] sm:$0xf]
        %v627 = vld [vmem:[%s10] sm:$0x1]
        %v628 = vpack.c.bf16 %v622, %v622
        %v630 = vlaneseq
        %v631 = vshrl.u32 %v630, 7
        %v632 = vsub.s32 0, %v631
        %v633 = vrot.slane %v627, %v632
        %v639 = vunpack.c.l.b16 %v623
        %v640 = vunpack.c.l.b16 %v624
        %v641 = vunpack.c.l.b16 %v625
        %v642 = vunpack.c.l.b16 %v626
        %v643 = vpack.c.b16 %v640, %v639
        %v644 = vpack.c.b16 %v642, %v641
        %v648 = vsel %vm474, %v628, 0
        %650 = vmatprep.subr.bf16.mxu0 0
        %651 = vmatpush1.bf16.msra.mxu0 %v643
        %652 = vmatprep.subr.bf16.mxu0 0
        %653 = vmatpush1.bf16.msra.mxu0 %v644
        %654 = vmatprep.subr.bf16.mxu0 0
        %655 = vmatpush1.bf16.msra.mxu0 0
        %656 = vmatprep.subr.bf16.mxu0 0
        %657 = vmatpush1.bf16.msra.mxu0 0
        %658 = vmatprep.subr.bf16.mxu0 0
        %659 = vmatpush1.bf16.msra.mxu0 0
        %660 = vmatprep.subr.bf16.mxu0 0
        %661 = vmatpush1.bf16.msra.mxu0 0
        %662 = vmatprep.subr.bf16.mxu0 0
        %663 = vmatpush1.bf16.msra.mxu0 0
        %664 = vmatprep.subr.bf16.mxu0 0
        %665 = vmatpush1.bf16.msra.mxu0 0
        %666 = vmatprep.subr.bf16.mxu0 0
        %667 = vmatpush1.bf16.msra.mxu0 0
        %668 = vmatprep.subr.bf16.mxu0 0
        %669 = vmatpush1.bf16.msra.mxu0 0
        %670 = vmatprep.subr.bf16.mxu0 0
        %671 = vmatpush1.bf16.msra.mxu0 0
        %672 = vmatprep.subr.bf16.mxu0 0
        %673 = vmatpush1.bf16.msra.mxu0 0
        %674 = vmatprep.subr.bf16.mxu0 0
        %675 = vmatpush1.bf16.msra.mxu0 0
        %676 = vmatprep.subr.bf16.mxu0 0
        %677 = vmatpush1.bf16.msra.mxu0 0
        %678 = vmatprep.subr.bf16.mxu0 0
        %679 = vmatpush1.bf16.msra.mxu0 0
        %680 = vmatprep.subr.bf16.mxu0 0
        %681 = vmatpush1.bf16.msra.mxu0 0
        %682 = vmatprep.mubr.bf16.mxu0 0
        %683 = vmatmul.mubr.bf16.gmra.mrb[0].mxu0 %v648
        %v684 = vpop.f32.mrb[0].mxu0
        %v685 = vadd.f32 %v633, %v684
        %v686 = vpop.f32.mrb[0].mxu0
        %v687 = vpop.f32.mrb[0].mxu0
        %v688 = vpop.f32.mrb[0].mxu0
        %689 = vdwg.mxu0
        %vm690 = vcmask 64512
        %691 = vst.msk [vmem:[%s409] sm:$0xff] %vm690, %v685
        %p692 = scmp.lt.s32.totalorder %s24, 1
        %s693 = scalar_select %p692, %s24, 1
        %s694 = smul.addr %s693, 8
        %s695 = scalar_lea.vmem %s11, %s694
        // Predicated region
        $region73: #{tpu_custom_call.1} parent=63 // pred_check
          %p696 = pneg %p278
        $region74: #{tpu_custom_call.1} parent=63 // pred_check_branch
          %698 = sbr.rel (%p696) target = $region76
        $region75: #{tpu_custom_call.1} parent=63 // pred_region
          _
        $region76: #{tpu_custom_call.1} parent=63 // pred_fallthru
          _
      $region64: #{tpu_custom_call.1} parent=5 // pred_fallthru
        _
      %p699 = scmp.le.s32.totalorder 2, %s19
      // Predicated region
      $region77: #{tpu_custom_call.1} parent=5 // pred_check
        %p700 = pneg %p699
      $region78: #{tpu_custom_call.1} parent=5 // pred_check_branch
        %702 = sbr.rel (%p700) target = $region80
      $region79: #{tpu_custom_call.1} parent=5 // pred_region
        %s703 = ssub.s32 %s19, 2
        // Predicated region
        $region81: #{tpu_custom_call.1} parent=79 // pred_check
          %p704 = pneg %p284
        $region82: #{tpu_custom_call.1} parent=79 // pred_check_branch
          %706 = sbr.rel (%p704) target = $region84
        $region83: #{tpu_custom_call.1} parent=79 // pred_region
          %p707 = scmp.lt.s32.totalorder %s25, 1
          %s708 = scalar_select %p707, %s25, 1
          %s709 = smul.addr %s708, 8
          %s710 = scalar_lea.vmem %s11, %s709
        $region84: #{tpu_custom_call.1} parent=79 // pred_fallthru
          _
      $region80: #{tpu_custom_call.1} parent=5 // pred_fallthru
        _
    $region6: #{tpu_custom_call.1} parent=1 // loop_footer
      %s23 = sadd.s32 1, %s19
    $region7: #{tpu_custom_call.1} parent=1 // loop_footer_branch
      %18 = sbr.rel target = $region3
    $region8: #{tpu_custom_call.1} parent=1 // loop_exit
      _
    %711 = vsyncpa [#allocation3], 1
    %s712 = scalar_lea.sflag [#allocation3], 1
    %713 = vsyncpa %s712, 1
    %714 = vsyncpa [#allocation5], 1

</llo_original>
